<compile_context>
chip_gen: v5e
topology: v5e:2x2
jax: 0.10.0
libtpu: 0.0.40
codegen_flags: <defaults>
</compile_context>

<pallas_src>
import math
import functools

import jax
import jax.numpy as jnp
from jax.experimental import pallas as pl
from jax.experimental.pallas import tpu as pltpu


# ----------------------------------------------------------------------------
# Kernel
# ----------------------------------------------------------------------------
def _make_kernel(T, E, H, D, tq, tk, compute_dtype):
    kv_per_q = tq // tk
    max_kv_tiles = T // tk

    def kernel(x_ref, wqkv_ref, w2h_ref, cos_ref, sin_ref, o_ref):
        cdt = compute_dtype
        qi = pl.program_id(1)

        # ---- Q projection + RoPE, whole-slab (no per-head math). -----------
        q_start = pl.multiple_of(qi * tq, tq)
        xq = x_ref[0, pl.ds(q_start, tq), :].astype(cdt)              # (tq, E)
        # One fused (tq, 2E) matmul: [Q ; rotate_half(Q)]; scale pre-folded.
        q_all = jax.lax.dot_general(
            xq, wqkv_ref[0:2 * E, :], (((1,), (1,)), ((), ())),
            preferred_element_type=jnp.float32)                       # (tq, 2E)
        cos_q = cos_ref[pl.ds(q_start, tq), :]                        # (tq, E)
        sin_q = sin_ref[pl.ds(q_start, tq), :]
        q2d = q_all[:, 0:E] * cos_q + q_all[:, E:2 * E] * sin_q       # (tq, E)

        # Head split just before the score matmul (see note at top of file).
        q3 = jnp.stack([q2d[:, h * D:(h + 1) * D] for h in range(H)],
                       axis=0).astype(cdt)                            # (H,tq,D)

        rows = qi * tq + jax.lax.broadcasted_iota(jnp.int32, (tq, tk), 0)
        cols = jax.lax.broadcasted_iota(jnp.int32, (tq, tk), 1)

        # ---- Causal flash loop over this segment's KV tiles. ---------------
        def kv_step(t, carry):
            m, l, acc = carry
            k_start = pl.multiple_of(t * tk, tk)
            xk = x_ref[0, pl.ds(k_start, tk), :].astype(cdt)          # (tk, E)
            # One fused (tk, 3E) matmul: [K ; rotate_half(K) ; V].
            kv_all = jax.lax.dot_general(
                xk, wqkv_ref[2 * E:5 * E, :], (((1,), (1,)), ((), ())),
                preferred_element_type=jnp.float32)                   # (tk, 3E)
            cos_k = cos_ref[pl.ds(k_start, tk), :]
            sin_k = sin_ref[pl.ds(k_start, tk), :]
            k2d = kv_all[:, 0:E] * cos_k + kv_all[:, E:2 * E] * sin_k
            v2d = kv_all[:, 2 * E:3 * E]
            k3 = jnp.stack([k2d[:, h * D:(h + 1) * D] for h in range(H)],
                           axis=0).astype(cdt)                        # (H,tk,D)
            v3 = jnp.stack([v2d[:, h * D:(h + 1) * D] for h in range(H)],
                           axis=0).astype(cdt)

            s = jnp.einsum('hqd,hkd->hqk', q3, k3,
                           preferred_element_type=jnp.float32)        # (H,tq,tk)
            mask = (rows >= k_start + cols)[None, :, :]
            s = jnp.where(mask, s, jnp.float32(-1e30))
            m_new = jnp.maximum(m, jnp.max(s, axis=-1, keepdims=True))
            alpha = jnp.exp(m - m_new)
            p = jnp.exp(s - m_new)
            l_new = alpha * l + jnp.sum(p, axis=-1, keepdims=True)
            acc_new = alpha * acc + jnp.einsum(
                'hqk,hkd->hqd', p.astype(cdt), v3,
                preferred_element_type=jnp.float32)
            return m_new, l_new, acc_new

        m0 = jnp.full((H, tq, 1), -jnp.inf, dtype=jnp.float32)
        l0 = jnp.zeros((H, tq, 1), dtype=jnp.float32)
        acc0 = jnp.zeros((H, tq, D), dtype=jnp.float32)

        if max_kv_tiles == 1:
            # Single KV tile (short segments): no loop needed.
            m, l, acc = kv_step(jnp.int32(0), (m0, l0, acc0))
        else:
            # Causal skip: only kv tiles with col_start < (qi + 1) * tq matter.
            num_kv = (qi + 1) * kv_per_q
            m, l, acc = jax.lax.fori_loop(0, num_kv, kv_step, (m0, l0, acc0))

        # ---- Normalize + output projection (lane-dense (tq, E) output). ----
        # reciprocal only touches the (H,tq,1) denominator; ~2^-12 rel error.
        o = acc * pl.reciprocal(l, approx=True)                       # (H,tq,D)
        out = jnp.zeros((tq, E), dtype=jnp.float32)
        for h in range(H):
            # Per-head MXU accumulation with leading-dim weight indexing —
            # replaces the head-merge concat/relayout.
            out = out + jax.lax.dot_general(
                o[h].astype(cdt), w2h_ref[h],
                (((1,), (0,)), ((), ())),
                preferred_element_type=jnp.float32)
        o_ref[0] = out.astype(o_ref.dtype)

    return kernel


# ----------------------------------------------------------------------------
# Wrapper
# ----------------------------------------------------------------------------
def _rope_angles(T, D, base=10000.0):
    # TODO(synk): RoPE class is not in the source; standard GPT-NeoX
    # rotate-half with base=10000 is assumed (kernel and reference share it).
    half = D // 2
    inv_freq = 1.0 / (base ** (jnp.arange(half, dtype=jnp.float32) / half))
    pos = jnp.arange(T, dtype=jnp.float32)
    ang = pos[:, None] * inv_freq[None, :]
    return jnp.cos(ang), jnp.sin(ang)                 # each (T, half)


def self_attn_flex_forward(x, fc1_w, fc2_w, num_head, head_size, *,
                           q_tile=256, kv_tile=256,
                           compute_dtype=jnp.bfloat16, rope_base=10000.0):
    """
    x:      (B, T, E)
    fc1_w:  (3E, E)  torch nn.Linear weight layout (out_features, in_features)
    fc2_w:  (E, E)
    returns (B, T, E)
    """
    B, T, E = x.shape
    H, D = num_head, head_size
    half = D // 2
    assert E == H * D and D % 2 == 0
    assert fc1_w.shape == (3 * E, E) and fc2_w.shape == (E, E)

    tq = min(q_tile, T)
    tk = min(kv_tile, tq)
    assert T % tq == 0 and tq % tk == 0

    scale = 1.0 / math.sqrt(D)

    # -------- Host-side weight prep (done once per call; in a real model this
    # would live at init).  rotate_half(x @ W^T) == x @ rot_rows(W)^T.
    def rot_rows(w):
        w4 = w.reshape(H, 2, half, E)
        return jnp.stack([-w4[:, 1], w4[:, 0]], axis=1).reshape(E, E)

    wq = fc1_w[0:E] * scale          # fold 1/sqrt(head_size) into Q weights
    wk = fc1_w[E:2 * E]
    wv = fc1_w[2 * E:3 * E]
    wqkv = jnp.concatenate(
        [wq, rot_rows(wq), wk, rot_rows(wk), wv], axis=0
    ).astype(compute_dtype)                                    # (5E, E) bf16
    # fc2 pre-split per head: w2h[h, d, e] = fc2_w[e, h*D + d]
    w2h = fc2_w.reshape(E, H, D).transpose(1, 2, 0).astype(compute_dtype)

    # -------- Lane-dense RoPE tables pre-expanded to (T, E).
    cos_h, sin_h = _rope_angles(T, D, rope_base)
    cos = jnp.tile(jnp.concatenate([cos_h, cos_h], axis=-1), (1, H))   # (T, E)
    sin = jnp.tile(jnp.concatenate([sin_h, sin_h], axis=-1), (1, H))

    num_q_tiles = T // tq
    kv_per_q = tq // tk

    # -------- Advisory cost estimate for the XLA scheduler.
    kv_tiles_visited = B * kv_per_q * num_q_tiles * (num_q_tiles + 1) // 2
    flops = (2 * B * T * (2 * E) * E                       # Q (+rot) projection
             + 2 * tk * (3 * E) * E * kv_tiles_visited     # K/V (+rot) projection
             + 4 * E * tq * tk * kv_tiles_visited          # QK^T and PV
             + 2 * B * T * E * E)                          # output projection
    transcendentals = kv_tiles_visited * H * tq * (tk + 1)
    bytes_accessed = (x.size * x.dtype.itemsize
                      + wqkv.size * wqkv.dtype.itemsize
                      + w2h.size * w2h.dtype.itemsize
                      + cos.size * 4 + sin.size * 4
                      + B * T * E * x.dtype.itemsize)

    kernel = _make_kernel(T, E, H, D, tq, tk, compute_dtype)

    # NOTE(v7x): re-derive tq/tk for the 64 MiB VMEM budget and consider
    # single-buffering the resident weight blocks if E is large.
    return pl.pallas_call(
        kernel,
        out_shape=jax.ShapeDtypeStruct((B, T, E), x.dtype),
        grid=(B, num_q_tiles),
        in_specs=[
            pl.BlockSpec((1, T, E), lambda b, q: (b, 0, 0)),       # x segment
            pl.BlockSpec((5 * E, E), lambda b, q: (0, 0)),         # fused QKV W
            pl.BlockSpec((H, D, E), lambda b, q: (0, 0, 0)),       # fc2 per head
            pl.BlockSpec((T, E), lambda b, q: (0, 0)),             # rope cos
            pl.BlockSpec((T, E), lambda b, q: (0, 0)),             # rope sin
        ],
        out_specs=pl.BlockSpec((1, tq, E), lambda b, q: (b, q, 0)),
        compiler_params=pltpu.CompilerParams(
            dimension_semantics=("parallel", "parallel"),
            vmem_limit_bytes=48 * 1024 * 1024),
        cost_estimate=pl.CostEstimate(
            flops=int(flops),
            transcendentals=int(transcendentals),
            bytes_accessed=int(bytes_accessed)),
    )(x, wqkv, w2h, cos, sin)


# ----------------------------------------------------------------------------
# Plain-JAX reference (same semantics: per-batch-segment causal attention).
# TODO(synk): the flex-attention BlockMask (from_kv_blocks + causal_mask_mod)
# is realized structurally as batch-block-diagonal + causal.
# ----------------------------------------------------------------------------
def _reference_forward(x, fc1_w, fc2_w, num_head, head_size, rope_base=10000.0):
    B, T, E = x.shape
    D = head_size
    half = D // 2
    cos, sin = _rope_angles(T, D, rope_base)
    hp = jax.lax.Precision.HIGHEST

    qkv = jnp.einsum('bte,ce->btc', x, fc1_w, precision=hp)
    q, k, v = jnp.split(qkv, 3, axis=-1)

    def split_heads(t):
        return t.reshape(B, T, num_head, D)

    q, k, v = split_heads(q), split_heads(k), split_heads(v)
    c = cos[None, :, None, :]
    s = sin[None, :, None, :]

    def rope(t):
        t1, t2 = t[..., :half], t[..., half:]
        return jnp.concatenate([t1 * c - t2 * s, t1 * s + t2 * c], axis=-1)

    q, k = rope(q), rope(k)
    logits = jnp.einsum('bqhd,bkhd->bhqk', q, k, precision=hp) / math.sqrt(D)
    causal = jnp.tril(jnp.ones((T, T), dtype=bool))
    logits = jnp.where(causal[None, None], logits, -jnp.inf)
    p = jax.nn.softmax(logits, axis=-1)
    o = jnp.einsum('bhqk,bkhd->bqhd', p, v, precision=hp).reshape(B, T, E)
    return jnp.einsum('bte,ce->btc', o, fc2_w, precision=hp)


# ----------------------------------------------------------------------------
# Main
# ----------------------------------------------------------------------------
if __name__ == "__main__":
    batch_size = 2
    num_token = 16
    emb_size = 32
    num_head = 4
    head_size = 8            # emb_size == num_head * head_size
    num_block = 4            # used only for fc_2 init std

    key = jax.random.PRNGKey(0)
    k_x, k_w1, k_w2 = jax.random.split(key, 3)

    x = jax.random.normal(k_x, (batch_size, num_token, emb_size), jnp.float32)
    fc1_w = 0.02 * jax.random.normal(
        k_w1, (3 * emb_size, emb_size), jnp.float32)
    fc2_w = (0.02 / math.sqrt(2.0 * num_block)) * jax.random.normal(
        k_w2, (emb_size, emb_size), jnp.float32)

    fwd = jax.jit(functools.partial(
        self_attn_flex_forward, num_head=num_head, head_size=head_size))
    out = fwd(x, fc1_w, fc2_w)
    jax.block_until_ready(out)

    assert out.shape == (batch_size, num_token, emb_size)
    assert bool(jnp.all(jnp.isfinite(out)))

    ref = _reference_forward(x, fc1_w, fc2_w, num_head, head_size)
    max_err = float(jnp.max(jnp.abs(out - ref)))
    assert max_err < 5e-4, f"mismatch vs reference: max abs err {max_err}"

    print("KERNEL_OK")
</pallas_src>

<mosaic_0001>
module attributes {stable_mosaic.version = 11 : i64} {
  func.func @kernel(%arg0: i32, %arg1: i32, %arg2: memref<1x16x32xf32, #tpu.memory_space<vmem>>, %arg3: memref<160x32xbf16, #tpu.memory_space<vmem>>, %arg4: memref<4x8x32xbf16, #tpu.memory_space<vmem>>, %arg5: memref<16x32xf32, #tpu.memory_space<vmem>>, %arg6: memref<16x32xf32, #tpu.memory_space<vmem>>, %arg7: memref<1x16x32xf32, #tpu.memory_space<vmem>>) attributes {dimension_semantics = [#tpu.dimension_semantics<parallel>, #tpu.dimension_semantics<parallel>], iteration_bounds = array<i64: 2, 1>, scalar_prefetch = 0 : i64, scratch_operands = 0 : i64, tpu.core_type = #tpu.core_type<tc>, window_params = [{transform_indices = @transform_0, window_bounds = array<i64: 1, 16, 32>}, {pipeline_mode = #tpu.pipeline_mode<synchronous>, transform_indices = @transform_1, window_bounds = array<i64: 160, 32>}, {pipeline_mode = #tpu.pipeline_mode<synchronous>, transform_indices = @transform_2, window_bounds = array<i64: 4, 8, 32>}, {pipeline_mode = #tpu.pipeline_mode<synchronous>, transform_indices = @transform_3, window_bounds = array<i64: 16, 32>}, {pipeline_mode = #tpu.pipeline_mode<synchronous>, transform_indices = @transform_4, window_bounds = array<i64: 16, 32>}, {transform_indices = @transform_5, window_bounds = array<i64: 1, 16, 32>}]} {
    %c16_i32 = arith.constant 16 : i32
    %0 = arith.muli %arg1, %c16_i32 : i32
    %1 = tpu.assume_multiple %0, 16 : i32
    %c0 = arith.constant 0 : index
    %2 = arith.index_cast %1 : i32 to index
    %c0_0 = arith.constant 0 : index
    %3 = vector.load %arg2[%c0, %2, %c0_0] : memref<1x16x32xf32, #tpu.memory_space<vmem>>, vector<1x16x32xf32>
    %4 = vector.shape_cast %3 : vector<1x16x32xf32> to vector<16x32xf32>
    %5 = arith.truncf %4 : vector<16x32xf32> to vector<16x32xbf16>
    %c0_1 = arith.constant 0 : index
    %c0_2 = arith.constant 0 : index
    %6 = vector.load %arg3[%c0_1, %c0_2] : memref<160x32xbf16, #tpu.memory_space<vmem>>, vector<64x32xbf16>
    %cst = arith.constant dense<0.000000e+00> : vector<16x64xf32>
    %7 = tpu.matmul %5, %6, %cst {dimension_numbers = #tpu.dot_dimension_numbers<[1], [1], [0], [0], [0, 0, 1, 0], [], []>} : vector<16x32xbf16>, vector<64x32xbf16>, vector<16x64xf32> -> vector<16x64xf32>
    %8 = arith.index_cast %1 : i32 to index
    %c0_3 = arith.constant 0 : index
    %9 = vector.load %arg5[%8, %c0_3] : memref<16x32xf32, #tpu.memory_space<vmem>>, vector<16x32xf32>
    %10 = arith.index_cast %1 : i32 to index
    %c0_4 = arith.constant 0 : index
    %11 = vector.load %arg6[%10, %c0_4] : memref<16x32xf32, #tpu.memory_space<vmem>>, vector<16x32xf32>
    %12 = vector.extract_strided_slice %7 {offsets = [0, 0], sizes = [16, 32], strides = [1, 1]} : vector<16x64xf32> to vector<16x32xf32>
    %13 = arith.mulf %12, %9 : vector<16x32xf32>
    %14 = vector.extract_strided_slice %7 {offsets = [0, 32], sizes = [16, 32], strides = [1, 1]} : vector<16x64xf32> to vector<16x32xf32>
    %15 = arith.mulf %14, %11 : vector<16x32xf32>
    %16 = arith.addf %13, %15 : vector<16x32xf32>
    %17 = vector.extract_strided_slice %16 {offsets = [0, 0], sizes = [16, 8], strides = [1, 1]} : vector<16x32xf32> to vector<16x8xf32>
    %18 = vector.extract_strided_slice %16 {offsets = [0, 8], sizes = [16, 8], strides = [1, 1]} : vector<16x32xf32> to vector<16x8xf32>
    %19 = vector.extract_strided_slice %16 {offsets = [0, 16], sizes = [16, 8], strides = [1, 1]} : vector<16x32xf32> to vector<16x8xf32>
    %20 = vector.extract_strided_slice %16 {offsets = [0, 24], sizes = [16, 8], strides = [1, 1]} : vector<16x32xf32> to vector<16x8xf32>
    %21 = vector.shape_cast %17 : vector<16x8xf32> to vector<1x16x8xf32>
    %22 = vector.shape_cast %18 : vector<16x8xf32> to vector<1x16x8xf32>
    %23 = vector.shape_cast %19 : vector<16x8xf32> to vector<1x16x8xf32>
    %24 = vector.shape_cast %20 : vector<16x8xf32> to vector<1x16x8xf32>
    %25 = tpu.concatenate %21, %22, %23, %24 in 0 : vector<1x16x8xf32>, vector<1x16x8xf32>, vector<1x16x8xf32>, vector<1x16x8xf32> -> vector<4x16x8xf32>
    %26 = arith.truncf %25 : vector<4x16x8xf32> to vector<4x16x8xbf16>
    %c16_i32_5 = arith.constant 16 : i32
    %27 = arith.muli %arg1, %c16_i32_5 : i32
    %28 = tpu.iota {dimensions = array<i32: 0>} : vector<16x16xi32>
    %29 = vector.broadcast %27 : i32 to vector<16x16xi32>
    %30 = arith.addi %29, %28 : vector<16x16xi32>
    %31 = tpu.iota {dimensions = array<i32: 1>} : vector<16x16xi32>
    %cst_6 = arith.constant 0xFF800000 : f32
    %32 = vector.broadcast %cst_6 : f32 to vector<4x16x1xf32>
    %cst_7 = arith.constant 0.000000e+00 : f32
    %33 = vector.broadcast %cst_7 : f32 to vector<4x16x1xf32>
    %cst_8 = arith.constant 0.000000e+00 : f32
    %34 = vector.broadcast %cst_8 : f32 to vector<4x16x8xf32>
    %c0_i32 = arith.constant 0 : i32
    %c16_i32_9 = arith.constant 16 : i32
    %35 = arith.muli %c0_i32, %c16_i32_9 : i32
    %36 = tpu.assume_multiple %35, 16 : i32
    %c0_10 = arith.constant 0 : index
    %37 = arith.index_cast %36 : i32 to index
    %c0_11 = arith.constant 0 : index
    %38 = vector.load %arg2[%c0_10, %37, %c0_11] : memref<1x16x32xf32, #tpu.memory_space<vmem>>, vector<1x16x32xf32>
    %39 = vector.shape_cast %38 : vector<1x16x32xf32> to vector<16x32xf32>
    %40 = arith.truncf %39 : vector<16x32xf32> to vector<16x32xbf16>
    %c64 = arith.constant 64 : index
    %c0_12 = arith.constant 0 : index
    %41 = vector.load %arg3[%c64, %c0_12] : memref<160x32xbf16, #tpu.memory_space<vmem>>, vector<96x32xbf16>
    %cst_13 = arith.constant dense<0.000000e+00> : vector<16x96xf32>
    %42 = tpu.matmul %40, %41, %cst_13 {dimension_numbers = #tpu.dot_dimension_numbers<[1], [1], [0], [0], [0, 0, 1, 0], [], []>} : vector<16x32xbf16>, vector<96x32xbf16>, vector<16x96xf32> -> vector<16x96xf32>
    %43 = arith.index_cast %36 : i32 to index
    %c0_14 = arith.constant 0 : index
    %44 = vector.load %arg5[%43, %c0_14] : memref<16x32xf32, #tpu.memory_space<vmem>>, vector<16x32xf32>
    %45 = arith.index_cast %36 : i32 to index
    %c0_15 = arith.constant 0 : index
    %46 = vector.load %arg6[%45, %c0_15] : memref<16x32xf32, #tpu.memory_space<vmem>>, vector<16x32xf32>
    %47 = vector.extract_strided_slice %42 {offsets = [0, 0], sizes = [16, 32], strides = [1, 1]} : vector<16x96xf32> to vector<16x32xf32>
    %48 = arith.mulf %47, %44 : vector<16x32xf32>
    %49 = vector.extract_strided_slice %42 {offsets = [0, 32], sizes = [16, 32], strides = [1, 1]} : vector<16x96xf32> to vector<16x32xf32>
    %50 = arith.mulf %49, %46 : vector<16x32xf32>
    %51 = arith.addf %48, %50 : vector<16x32xf32>
    %52 = vector.extract_strided_slice %42 {offsets = [0, 64], sizes = [16, 32], strides = [1, 1]} : vector<16x96xf32> to vector<16x32xf32>
    %53 = vector.extract_strided_slice %51 {offsets = [0, 0], sizes = [16, 8], strides = [1, 1]} : vector<16x32xf32> to vector<16x8xf32>
    %54 = vector.extract_strided_slice %51 {offsets = [0, 8], sizes = [16, 8], strides = [1, 1]} : vector<16x32xf32> to vector<16x8xf32>
    %55 = vector.extract_strided_slice %51 {offsets = [0, 16], sizes = [16, 8], strides = [1, 1]} : vector<16x32xf32> to vector<16x8xf32>
    %56 = vector.extract_strided_slice %51 {offsets = [0, 24], sizes = [16, 8], strides = [1, 1]} : vector<16x32xf32> to vector<16x8xf32>
    %57 = vector.shape_cast %53 : vector<16x8xf32> to vector<1x16x8xf32>
    %58 = vector.shape_cast %54 : vector<16x8xf32> to vector<1x16x8xf32>
    %59 = vector.shape_cast %55 : vector<16x8xf32> to vector<1x16x8xf32>
    %60 = vector.shape_cast %56 : vector<16x8xf32> to vector<1x16x8xf32>
    %61 = tpu.concatenate %57, %58, %59, %60 in 0 : vector<1x16x8xf32>, vector<1x16x8xf32>, vector<1x16x8xf32>, vector<1x16x8xf32> -> vector<4x16x8xf32>
    %62 = arith.truncf %61 : vector<4x16x8xf32> to vector<4x16x8xbf16>
    %63 = vector.extract_strided_slice %52 {offsets = [0, 0], sizes = [16, 8], strides = [1, 1]} : vector<16x32xf32> to vector<16x8xf32>
    %64 = vector.extract_strided_slice %52 {offsets = [0, 8], sizes = [16, 8], strides = [1, 1]} : vector<16x32xf32> to vector<16x8xf32>
    %65 = vector.extract_strided_slice %52 {offsets = [0, 16], sizes = [16, 8], strides = [1, 1]} : vector<16x32xf32> to vector<16x8xf32>
    %66 = vector.extract_strided_slice %52 {offsets = [0, 24], sizes = [16, 8], strides = [1, 1]} : vector<16x32xf32> to vector<16x8xf32>
    %67 = vector.shape_cast %63 : vector<16x8xf32> to vector<1x16x8xf32>
    %68 = vector.shape_cast %64 : vector<16x8xf32> to vector<1x16x8xf32>
    %69 = vector.shape_cast %65 : vector<16x8xf32> to vector<1x16x8xf32>
    %70 = vector.shape_cast %66 : vector<16x8xf32> to vector<1x16x8xf32>
    %71 = tpu.concatenate %67, %68, %69, %70 in 0 : vector<1x16x8xf32>, vector<1x16x8xf32>, vector<1x16x8xf32>, vector<1x16x8xf32> -> vector<4x16x8xf32>
    %72 = arith.truncf %71 : vector<4x16x8xf32> to vector<4x16x8xbf16>
    "tpu.trace_start"() <{level = 10 : i32, message = "hqd,hkd->hqk"}> : () -> ()
    %cst_16 = arith.constant dense<0.000000e+00> : vector<4x16x16xf32>
    %73 = tpu.matmul %26, %62, %cst_16 {dimension_numbers = #tpu.dot_dimension_numbers<[2], [2], [1], [1], [0, 0, 0, 1, 1, 1], [0], [0]>} : vector<4x16x8xbf16>, vector<4x16x8xbf16>, vector<4x16x16xf32> -> vector<4x16x16xf32>
    "tpu.trace_stop"() : () -> ()
    %74 = vector.broadcast %36 : i32 to vector<16x16xi32>
    %75 = arith.addi %74, %31 : vector<16x16xi32>
    %76 = arith.cmpi sge, %30, %75 : vector<16x16xi32>
    %77 = vector.shape_cast %76 : vector<16x16xi1> to vector<1x16x16xi1>
    %cst_17 = arith.constant -1.000000e+30 : f32
    %78 = vector.shape_cast %77 : vector<1x16x16xi1> to vector<1x16x16xi1>
    %79 = vector.broadcast %78 : vector<1x16x16xi1> to vector<4x16x16xi1>
    %80 = vector.broadcast %cst_17 : f32 to vector<4x16x16xf32>
    %81 = arith.select %79, %73, %80 : vector<4x16x16xi1>, vector<4x16x16xf32>
    %cst_18 = arith.constant dense<0xFF800000> : vector<4x16xf32>
    %82 = vector.multi_reduction <maximumf>, %81, %cst_18 [2] : vector<4x16x16xf32> to vector<4x16xf32>
    %83 = vector.shape_cast %82 : vector<4x16xf32> to vector<4x16x1xf32>
    %84 = arith.maximumf %32, %83 : vector<4x16x1xf32>
    %85 = arith.subf %32, %84 : vector<4x16x1xf32>
    %86 = math.exp %85 : vector<4x16x1xf32>
    %87 = vector.broadcast %84 : vector<4x16x1xf32> to vector<4x16x16xf32>
    %88 = arith.subf %81, %87 : vector<4x16x16xf32>
    %89 = math.exp %88 : vector<4x16x16xf32>
    %90 = arith.mulf %86, %33 : vector<4x16x1xf32>
    %cst_19 = arith.constant dense<0.000000e+00> : vector<4x16xf32>
    %91 = vector.multi_reduction <add>, %89, %cst_19 [2] : vector<4x16x16xf32> to vector<4x16xf32>
    %92 = vector.shape_cast %91 : vector<4x16xf32> to vector<4x16x1xf32>
    %93 = arith.addf %90, %92 : vector<4x16x1xf32>
    %94 = vector.broadcast %86 : vector<4x16x1xf32> to vector<4x16x8xf32>
    %95 = arith.mulf %94, %34 : vector<4x16x8xf32>
    %96 = arith.truncf %89 : vector<4x16x16xf32> to vector<4x16x16xbf16>
    "tpu.trace_start"() <{level = 10 : i32, message = "hqk,hkd->hqd"}> : () -> ()
    %cst_20 = arith.constant dense<0.000000e+00> : vector<4x16x8xf32>
    %97 = tpu.matmul %96, %72, %cst_20 {dimension_numbers = #tpu.dot_dimension_numbers<[2], [1], [1], [2], [0, 0, 0, 1, 1, 2], [0], [0]>} : vector<4x16x16xbf16>, vector<4x16x8xbf16>, vector<4x16x8xf32> -> vector<4x16x8xf32>
    "tpu.trace_stop"() : () -> ()
    %98 = arith.addf %95, %97 : vector<4x16x8xf32>
    %99 = tpu.reciprocal %93 {approx = true} : vector<4x16x1xf32> -> vector<4x16x1xf32>
    %100 = vector.broadcast %99 : vector<4x16x1xf32> to vector<4x16x8xf32>
    %101 = arith.mulf %98, %100 : vector<4x16x8xf32>
    %cst_21 = arith.constant 0.000000e+00 : f32
    %102 = vector.broadcast %cst_21 : f32 to vector<16x32xf32>
    %103 = vector.extract_strided_slice %101 {offsets = [0, 0, 0], sizes = [1, 16, 8], strides = [1, 1, 1]} : vector<4x16x8xf32> to vector<1x16x8xf32>
    %104 = vector.shape_cast %103 : vector<1x16x8xf32> to vector<16x8xf32>
    %105 = arith.truncf %104 : vector<16x8xf32> to vector<16x8xbf16>
    %c0_22 = arith.constant 0 : index
    %c0_23 = arith.constant 0 : index
    %c0_24 = arith.constant 0 : index
    %106 = vector.load %arg4[%c0_22, %c0_23, %c0_24] : memref<4x8x32xbf16, #tpu.memory_space<vmem>>, vector<1x8x32xbf16>
    %107 = vector.shape_cast %106 : vector<1x8x32xbf16> to vector<8x32xbf16>
    %cst_25 = arith.constant dense<0.000000e+00> : vector<16x32xf32>
    %108 = tpu.matmul %105, %107, %cst_25 {dimension_numbers = #tpu.dot_dimension_numbers<[1], [0], [0], [1], [0, 0, 1, 1], [], []>} : vector<16x8xbf16>, vector<8x32xbf16>, vector<16x32xf32> -> vector<16x32xf32>
    %109 = arith.addf %102, %108 : vector<16x32xf32>
    %110 = vector.extract_strided_slice %101 {offsets = [1, 0, 0], sizes = [1, 16, 8], strides = [1, 1, 1]} : vector<4x16x8xf32> to vector<1x16x8xf32>
    %111 = vector.shape_cast %110 : vector<1x16x8xf32> to vector<16x8xf32>
    %112 = arith.truncf %111 : vector<16x8xf32> to vector<16x8xbf16>
    %c1 = arith.constant 1 : index
    %c0_26 = arith.constant 0 : index
    %c0_27 = arith.constant 0 : index
    %113 = vector.load %arg4[%c1, %c0_26, %c0_27] : memref<4x8x32xbf16, #tpu.memory_space<vmem>>, vector<1x8x32xbf16>
    %114 = vector.shape_cast %113 : vector<1x8x32xbf16> to vector<8x32xbf16>
    %cst_28 = arith.constant dense<0.000000e+00> : vector<16x32xf32>
    %115 = tpu.matmul %112, %114, %cst_28 {dimension_numbers = #tpu.dot_dimension_numbers<[1], [0], [0], [1], [0, 0, 1, 1], [], []>} : vector<16x8xbf16>, vector<8x32xbf16>, vector<16x32xf32> -> vector<16x32xf32>
    %116 = arith.addf %109, %115 : vector<16x32xf32>
    %117 = vector.extract_strided_slice %101 {offsets = [2, 0, 0], sizes = [1, 16, 8], strides = [1, 1, 1]} : vector<4x16x8xf32> to vector<1x16x8xf32>
    %118 = vector.shape_cast %117 : vector<1x16x8xf32> to vector<16x8xf32>
    %119 = arith.truncf %118 : vector<16x8xf32> to vector<16x8xbf16>
    %c2 = arith.constant 2 : index
    %c0_29 = arith.constant 0 : index
    %c0_30 = arith.constant 0 : index
    %120 = vector.load %arg4[%c2, %c0_29, %c0_30] : memref<4x8x32xbf16, #tpu.memory_space<vmem>>, vector<1x8x32xbf16>
    %121 = vector.shape_cast %120 : vector<1x8x32xbf16> to vector<8x32xbf16>
    %cst_31 = arith.constant dense<0.000000e+00> : vector<16x32xf32>
    %122 = tpu.matmul %119, %121, %cst_31 {dimension_numbers = #tpu.dot_dimension_numbers<[1], [0], [0], [1], [0, 0, 1, 1], [], []>} : vector<16x8xbf16>, vector<8x32xbf16>, vector<16x32xf32> -> vector<16x32xf32>
    %123 = arith.addf %116, %122 : vector<16x32xf32>
    %124 = vector.extract_strided_slice %101 {offsets = [3, 0, 0], sizes = [1, 16, 8], strides = [1, 1, 1]} : vector<4x16x8xf32> to vector<1x16x8xf32>
    %125 = vector.shape_cast %124 : vector<1x16x8xf32> to vector<16x8xf32>
    %126 = arith.truncf %125 : vector<16x8xf32> to vector<16x8xbf16>
    %c3 = arith.constant 3 : index
    %c0_32 = arith.constant 0 : index
    %c0_33 = arith.constant 0 : index
    %127 = vector.load %arg4[%c3, %c0_32, %c0_33] : memref<4x8x32xbf16, #tpu.memory_space<vmem>>, vector<1x8x32xbf16>
    %128 = vector.shape_cast %127 : vector<1x8x32xbf16> to vector<8x32xbf16>
    %cst_34 = arith.constant dense<0.000000e+00> : vector<16x32xf32>
    %129 = tpu.matmul %126, %128, %cst_34 {dimension_numbers = #tpu.dot_dimension_numbers<[1], [0], [0], [1], [0, 0, 1, 1], [], []>} : vector<16x8xbf16>, vector<8x32xbf16>, vector<16x32xf32> -> vector<16x32xf32>
    %130 = arith.addf %123, %129 : vector<16x32xf32>
    %c0_35 = arith.constant 0 : index
    %c0_36 = arith.constant 0 : index
    %c0_37 = arith.constant 0 : index
    %131 = vector.load %arg7[%c0_35, %c0_36, %c0_37] : memref<1x16x32xf32, #tpu.memory_space<vmem>>, vector<1x16x32xf32>
    %132 = vector.shape_cast %131 : vector<1x16x32xf32> to vector<16x32xf32>
    %133 = vector.shape_cast %130 : vector<16x32xf32> to vector<1x16x32xf32>
    tpu.vector_store %arg7[%c0_35, %c0_36, %c0_37], %133 {strides = array<i32>} : memref<1x16x32xf32, #tpu.memory_space<vmem>>, vector<1x16x32xf32>,
    return
  }
  func.func @transform_0(%arg0: i32, %arg1: i32) -> (i32, i32, i32) {
    %c0_i32 = arith.constant 0 : i32
    %c0_i32_0 = arith.constant 0 : i32
    %c0_i32_1 = arith.constant 0 : i32
    return %arg0, %c0_i32, %c0_i32_0 : i32, i32, i32
  }
  func.func @transform_1(%arg0: i32, %arg1: i32) -> (i32, i32) {
    %c0_i32 = arith.constant 0 : i32
    %c0_i32_0 = arith.constant 0 : i32
    %c0_i32_1 = arith.constant 0 : i32
    return %c0_i32, %c0_i32_0 : i32, i32
  }
  func.func @transform_2(%arg0: i32, %arg1: i32) -> (i32, i32, i32) {
    %c0_i32 = arith.constant 0 : i32
    %c0_i32_0 = arith.constant 0 : i32
    %c0_i32_1 = arith.constant 0 : i32
    %c0_i32_2 = arith.constant 0 : i32
    return %c0_i32, %c0_i32_0, %c0_i32_1 : i32, i32, i32
  }
  func.func @transform_3(%arg0: i32, %arg1: i32) -> (i32, i32) {
    %c0_i32 = arith.constant 0 : i32
    %c0_i32_0 = arith.constant 0 : i32
    %c0_i32_1 = arith.constant 0 : i32
    return %c0_i32, %c0_i32_0 : i32, i32
  }
  func.func @transform_4(%arg0: i32, %arg1: i32) -> (i32, i32) {
    %c0_i32 = arith.constant 0 : i32
    %c0_i32_0 = arith.constant 0 : i32
    %c0_i32_1 = arith.constant 0 : i32
    return %c0_i32, %c0_i32_0 : i32, i32
  }
  func.func @transform_5(%arg0: i32, %arg1: i32) -> (i32, i32, i32) {
    %c0_i32 = arith.constant 0 : i32
    %c0_i32_0 = arith.constant 0 : i32
    return %arg0, %arg1, %c0_i32 : i32, i32, i32
  }
}

</mosaic_0001>

<llo_original>
// kernel: self_attn_flex_forward.1
$region0: #{self_attn_flex_forward.1}
  #allocation0 [shape = 'u32[]', space=smem, size = 0x4, offset = 0x4, fixed_abs, tag = 'smem constant byte address 0x4 - core index']
  #allocation1 [shape = 'u32[72,128]{1,0:T(1,128)}', space=vmem, size = 0x9000, scoped, tag = 'internal scratch']
  %s0 = inlined_call_operand.vmem [shape: f32[2,16,32], index: 0, kind: input, shape index: {}]
  %s1 = inlined_call_operand.vmem [shape: bf16[160,32], index: 1, kind: input, shape index: {}]
  %s2 = inlined_call_operand.vmem [shape: bf16[4,8,32], index: 2, kind: input, shape index: {}]
  %s3 = inlined_call_operand.vmem [shape: f32[16,32], index: 3, kind: input, shape index: {}]
  %s4 = inlined_call_operand.vmem [shape: f32[16,32], index: 4, kind: input, shape index: {}]
  %s5 = inlined_call_operand.hbm [shape: f32[2,16,32], index: 5, kind: output, shape index: {}]
  %s6 = sld [smem:[#allocation0]]
  $region53: #{self_attn_flex_forward.1} parent=0
    _
  %s8 = ssub.s32 1, %s6
  %s9 = scalar_select 0, %s8, %s6
  $region1: #{self_attn_flex_forward.1} parent=0
    #allocation2 [shape = 'u8[16384]{0}', space=vmem, size = 0x4000, scoped, tag = 'output window, operand 0']
    #allocation3 [shape = 's32[2]{0}', space=sflag, size = 0x8, scoped, tag = 'scoped memory for self_attn_flex_forward.1']
    %10 = vsyncpa [#allocation3], 0
    %s11 = scalar_lea.sflag [#allocation3], 1
    %12 = vsyncpa %s11, 0
    loop: start=0, step=1, limit=4
    $region2: #{self_attn_flex_forward.1} parent=1 // loop_pre_header
      _
    $region3: #{self_attn_flex_forward.1} parent=1 // loop_header
      %s14 = sphi 0, %s18
      %p15 = scmp.ge.s32.totalorder %s14, 4
      %s21 = sphi 0, %s33
      %s22 = sphi 0, %s29
      %s23 = sphi 0, %s21
      %s24 = sphi 0, %s22
      %s25 = sphi 0, %s23
      %s26 = sphi 0, %s24
      %s36 = sphi 0, %s38
      %s39 = sphi 0, %s36
      %s40 = sphi 0, %s39
      %s56 = sphi 0, %s40
      %s60 = sphi 0, %s60
      %s62 = sphi 0, %s60
      %s63 = sphi 0, %s62
      %s77 = sphi 0, %s63
      %s81 = sphi 0, %s81
      %s83 = sphi 0, %s81
      %s84 = sphi 0, %s83
      %s98 = sphi 0, %s84
      %s102 = sphi 0, %s102
      %s104 = sphi 0, %s102
      %s105 = sphi 0, %s104
      %s119 = sphi 0, %s105
      %s123 = sphi 0, %s123
      %s125 = sphi 0, %s123
      %s126 = sphi 0, %s125
      %s140 = sphi 0, %s126
      %s148 = sphi 0, %s150
      %s151 = sphi 0, %s148
      %s152 = sphi 0, %s151
      %s168 = sphi 0, %s152
    $region4: #{self_attn_flex_forward.1} parent=1 // loop_header_branch
      %17 = sbr.rel (%p15) target = $region8
    $region5: #{self_attn_flex_forward.1} parent=1 // loop_body
      %s19 = ssub.s32 %s14, 1
      %s20 = ssub.s32 %s14, 2
      %s27 = sadd.s32 1, %s22
      %p28 = scmp.ge.s32.totalorder %s27, 1
      %s29 = scalar_select %p28, 0, %s27
      %s30 = sadd.s32 1, %s21
      %s31 = scalar_select %p28, %s30, %s21
      %p32 = scmp.ge.s32.totalorder %s31, 2
      %s33 = scalar_select %p32, 0, %s31
      %s34 = ssub.s32 %s21, %s33
      %p35 = scmp.eq.s32.totalorder %s34, 0
      %s37 = sadd.s32 %s36, 1
      %s38 = scalar_select %p35, %s36, %s37
      %p41 = pneg %p35
      %p42 = scmp.eq.s32.totalorder %s14, 1
      %p43 = por %p41, %p42
      %p44 = scmp.ne.s32.totalorder %s36, %s39
      %p45 = scmp.eq.s32.totalorder %s14, 0
      %p46 = por %p44, %p45
      %p47 = scmp.ne.s32.totalorder %s36, %s39
      %p48 = scmp.eq.s32.totalorder %s19, 1
      %p49 = por %p47, %p48
      %p50 = scmp.ne.s32.totalorder %s39, %s40
      %p51 = scmp.eq.s32.totalorder %s19, 0
      %p52 = por %p50, %p51
      %p53 = scmp.ne.s32.totalorder %s39, %s40
      %p54 = scmp.eq.s32.totalorder %s20, 1
      %p55 = por %p53, %p54
      %p57 = scmp.ne.s32.totalorder %s40, %s56
      %p58 = scmp.eq.s32.totalorder %s20, 0
      %p59 = por %p57, %p58
      %s61 = sadd.s32 %s60, 1
      %p64 = scmp.eq.s32.totalorder %s14, 1
      %p65 = scmp.ne.s32.totalorder %s60, %s62
      %p66 = scmp.eq.s32.totalorder %s14, 0
      %p67 = por %p65, %p66
      %p68 = scmp.ne.s32.totalorder %s60, %s62
      %p69 = scmp.eq.s32.totalorder %s19, 1
      %p70 = por %p68, %p69
      %p71 = scmp.ne.s32.totalorder %s62, %s63
      %p72 = scmp.eq.s32.totalorder %s19, 0
      %p73 = por %p71, %p72
      %p74 = scmp.ne.s32.totalorder %s62, %s63
      %p75 = scmp.eq.s32.totalorder %s20, 1
      %p76 = por %p74, %p75
      %p78 = scmp.ne.s32.totalorder %s63, %s77
      %p79 = scmp.eq.s32.totalorder %s20, 0
      %p80 = por %p78, %p79
      %s82 = sadd.s32 %s81, 1
      %p85 = scmp.eq.s32.totalorder %s14, 1
      %p86 = scmp.ne.s32.totalorder %s81, %s83
      %p87 = scmp.eq.s32.totalorder %s14, 0
      %p88 = por %p86, %p87
      %p89 = scmp.ne.s32.totalorder %s81, %s83
      %p90 = scmp.eq.s32.totalorder %s19, 1
      %p91 = por %p89, %p90
      %p92 = scmp.ne.s32.totalorder %s83, %s84
      %p93 = scmp.eq.s32.totalorder %s19, 0
      %p94 = por %p92, %p93
      %p95 = scmp.ne.s32.totalorder %s83, %s84
      %p96 = scmp.eq.s32.totalorder %s20, 1
      %p97 = por %p95, %p96
      %p99 = scmp.ne.s32.totalorder %s84, %s98
      %p100 = scmp.eq.s32.totalorder %s20, 0
      %p101 = por %p99, %p100
      %s103 = sadd.s32 %s102, 1
      %p106 = scmp.eq.s32.totalorder %s14, 1
      %p107 = scmp.ne.s32.totalorder %s102, %s104
      %p108 = scmp.eq.s32.totalorder %s14, 0
      %p109 = por %p107, %p108
      %p110 = scmp.ne.s32.totalorder %s102, %s104
      %p111 = scmp.eq.s32.totalorder %s19, 1
      %p112 = por %p110, %p111
      %p113 = scmp.ne.s32.totalorder %s104, %s105
      %p114 = scmp.eq.s32.totalorder %s19, 0
      %p115 = por %p113, %p114
      %p116 = scmp.ne.s32.totalorder %s104, %s105
      %p117 = scmp.eq.s32.totalorder %s20, 1
      %p118 = por %p116, %p117
      %p120 = scmp.ne.s32.totalorder %s105, %s119
      %p121 = scmp.eq.s32.totalorder %s20, 0
      %p122 = por %p120, %p121
      %s124 = sadd.s32 %s123, 1
      %p127 = scmp.eq.s32.totalorder %s14, 1
      %p128 = scmp.ne.s32.totalorder %s123, %s125
      %p129 = scmp.eq.s32.totalorder %s14, 0
      %p130 = por %p128, %p129
      %p131 = scmp.ne.s32.totalorder %s123, %s125
      %p132 = scmp.eq.s32.totalorder %s19, 1
      %p133 = por %p131, %p132
      %p134 = scmp.ne.s32.totalorder %s125, %s126
      %p135 = scmp.eq.s32.totalorder %s19, 0
      %p136 = por %p134, %p135
      %p137 = scmp.ne.s32.totalorder %s125, %s126
      %p138 = scmp.eq.s32.totalorder %s20, 1
      %p139 = por %p137, %p138
      %p141 = scmp.ne.s32.totalorder %s126, %s140
      %p142 = scmp.eq.s32.totalorder %s20, 0
      %p143 = por %p141, %p142
      %s144 = ssub.s32 %s21, %s33
      %s145 = ssub.s32 %s22, %s29
      %s146 = sor.u32 %s144, %s145
      %p147 = scmp.eq.s32.totalorder %s146, 0
      %s149 = sadd.s32 %s148, 1
      %s150 = scalar_select %p147, %s148, %s149
      %p153 = pneg %p147
      %p154 = scmp.eq.s32.totalorder %s14, 1
      %p155 = por %p153, %p154
      %p156 = scmp.ne.s32.totalorder %s148, %s151
      %p157 = scmp.eq.s32.totalorder %s14, 0
      %p158 = por %p156, %p157
      %p159 = scmp.ne.s32.totalorder %s148, %s151
      %p160 = scmp.eq.s32.totalorder %s19, 1
      %p161 = por %p159, %p160
      %p162 = scmp.ne.s32.totalorder %s151, %s152
      %p163 = scmp.eq.s32.totalorder %s19, 0
      %p164 = por %p162, %p163
      %p165 = scmp.ne.s32.totalorder %s151, %s152
      %p166 = scmp.eq.s32.totalorder %s20, 1
      %p167 = por %p165, %p166
      %p169 = scmp.ne.s32.totalorder %s152, %s168
      %p170 = scmp.eq.s32.totalorder %s20, 0
      %p171 = por %p169, %p170
      %p172 = scmp.le.s32.totalorder 1, %s14
      %p173 = scmp.lt.s32.totalorder %s14, 3
      %p174 = pnand %p172, %p173
      %p175 = pneg %p174
      // Predicated region
      $region9: #{self_attn_flex_forward.1} parent=5 // pred_check
        _
      $region10: #{self_attn_flex_forward.1} parent=5 // pred_check_branch
        %177 = sbr.rel (%p174) target = $region12
      $region11: #{self_attn_flex_forward.1} parent=5 // pred_region
        %s178 = ssub.s32 %s14, 1
        // Predicated region
        $region13: #{self_attn_flex_forward.1} parent=11 // pred_check
          %p179 = pneg %p73
        $region14: #{self_attn_flex_forward.1} parent=11 // pred_check_branch
          %181 = sbr.rel (%p179) target = $region16
        $region15: #{self_attn_flex_forward.1} parent=11 // pred_region
          _
        $region16: #{self_attn_flex_forward.1} parent=11 // pred_fallthru
          _
        // Predicated region
        $region17: #{self_attn_flex_forward.1} parent=11 // pred_check
          %p182 = pneg %p94
        $region18: #{self_attn_flex_forward.1} parent=11 // pred_check_branch
          %184 = sbr.rel (%p182) target = $region20
        $region19: #{self_attn_flex_forward.1} parent=11 // pred_region
          _
        $region20: #{self_attn_flex_forward.1} parent=11 // pred_fallthru
          _
        // Predicated region
        $region21: #{self_attn_flex_forward.1} parent=11 // pred_check
          %p185 = pneg %p115
        $region22: #{self_attn_flex_forward.1} parent=11 // pred_check_branch
          %187 = sbr.rel (%p185) target = $region24
        $region23: #{self_attn_flex_forward.1} parent=11 // pred_region
          _
        $region24: #{self_attn_flex_forward.1} parent=11 // pred_fallthru
          _
        // Predicated region
        $region25: #{self_attn_flex_forward.1} parent=11 // pred_check
          %p188 = pneg %p136
        $region26: #{self_attn_flex_forward.1} parent=11 // pred_check_branch
          %190 = sbr.rel (%p188) target = $region28
        $region27: #{self_attn_flex_forward.1} parent=11 // pred_region
          _
        $region28: #{self_attn_flex_forward.1} parent=11 // pred_fallthru
          _
      $region12: #{self_attn_flex_forward.1} parent=5 // pred_fallthru
        _
      %p191 = scmp.lt.s32.totalorder %s14, 2
      // Predicated region
      $region29: #{self_attn_flex_forward.1} parent=5 // pred_check
        %p192 = pneg %p191
      $region30: #{self_attn_flex_forward.1} parent=5 // pred_check_branch
        %194 = sbr.rel (%p192) target = $region32
      $region31: #{self_attn_flex_forward.1} parent=5 // pred_region
        // Predicated region
        $region33: #{self_attn_flex_forward.1} parent=31 // pred_check
          %p195 = pneg %p46
        $region34: #{self_attn_flex_forward.1} parent=31 // pred_check_branch
          %197 = sbr.rel (%p195) target = $region36
        $region35: #{self_attn_flex_forward.1} parent=31 // pred_region
          %p198 = scmp.lt.s32.totalorder %s21, 1
          %s199 = scalar_select %p198, %s21, 1
          %s200 = smul.addr %s199, 2
          %s201 = smul.addr %s200, 8
          %s202 = scalar_lea.vmem %s0, %s201
        $region36: #{self_attn_flex_forward.1} parent=31 // pred_fallthru
          _
      $region32: #{self_attn_flex_forward.1} parent=5 // pred_fallthru
        _
      %p203 = scmp.le.s32.totalorder 1, %s14
      %p204 = scmp.lt.s32.totalorder %s14, 3
      %p205 = pnand %p203, %p204
      %p206 = pneg %p205
      // Predicated region
      $region37: #{self_attn_flex_forward.1} parent=5 // pred_check
        _
      $region38: #{self_attn_flex_forward.1} parent=5 // pred_check_branch
        %208 = sbr.rel (%p205) target = $region40
      $region39: #{self_attn_flex_forward.1} parent=5 // pred_region
        %s209 = ssub.s32 %s14, 1
        %p210 = scmp.lt.s32.totalorder %s23, 1
        %s211 = scalar_select %p210, %s23, 1
        %s212 = smul.addr %s211, 2
        %s213 = smul.addr %s212, 8
        %s214 = scalar_lea.vmem %s0, %s213
        %p215 = pneg %p52
        %p216 = pneg %p49
        %p217 = pneg %p73
        %p218 = pneg %p70
        %p219 = pneg %p94
        %p220 = pneg %p91
        %p221 = pneg %p115
        %p222 = pneg %p112
        %p223 = pneg %p136
        %p224 = pneg %p133
        %p225 = pneg %p164
        %p226 = pneg %p161
        %s227 = sand.u32 %s151, 1
        %s228 = scalar_lea.sflag [#allocation3], %s227
        %s229 = sand.u32 %s151, 1
        %s230 = smul.addr %s229, 16
        %s231 = scalar_lea.vmem [#allocation2], %s230
        %p232 = scmp.lt.s32.totalorder %s23, 1
        %s233 = scalar_select %p232, %s23, 1
        %s234 = smul.addr %s233, 2
        %s235 = smul.addr %s234, 8
        %s236 = scalar_lea.vmem %s0, %s235
        %s237 = smul.u32 2, %s24
        %s239 = smul.u32 %s24, 16
        %s240 = scalar_lea.vmem %s236, %s239
        %v241 = vld [vmem:[%s240] sm:$0xff]
        %v242 = vld [vmem:[%s240 + $0x8] sm:$0xff]
        %v243 = vpack.c.bf16 %v242, %v241
        %v244 = vld [vmem:[%s1] sm:$0xf]
        %v245 = vld [vmem:[%s1 + $0x4] sm:$0xf]
        %v246 = vld [vmem:[%s1 + $0x8] sm:$0xf]
        %v247 = vld [vmem:[%s1 + $0xc] sm:$0xf]
        %v248 = vld [vmem:[%s1 + $0x10] sm:$0xf]
        %v249 = vld [vmem:[%s1 + $0x14] sm:$0xf]
        %v250 = vld [vmem:[%s1 + $0x18] sm:$0xf]
        %v251 = vld [vmem:[%s1 + $0x1c] sm:$0xf]
        %v260 = vunpack.c.l.b16 %v244
        %v261 = vunpack.c.l.b16 %v245
        %v262 = vunpack.c.l.b16 %v246
        %v263 = vunpack.c.l.b16 %v247
        %v264 = vunpack.c.l.b16 %v248
        %v265 = vunpack.c.l.b16 %v249
        %v266 = vunpack.c.l.b16 %v250
        %v267 = vunpack.c.l.b16 %v251
        %v268 = vpack.c.b16 %v261, %v260
        %v269 = vpack.c.b16 %v263, %v262
        %v270 = vpack.c.b16 %v265, %v264
        %v271 = vpack.c.b16 %v267, %v266
        %vm272 = vcmask 261120
        %v274 = vsel %vm272, %v243, 0
        %v277 = vsel %vm272, %v268, 0
        %v280 = vsel %vm272, %v269, 0
        %v283 = vsel %vm272, %v270, 0
        %v286 = vsel %vm272, %v271, 0
        %288 = vmatpush.bf16.xpose.msra.mxu0 0
        %289 = vmatpush.bf16.xpose.msra.mxu0 0
        %290 = vmatpush.bf16.xpose.msra.mxu0 0
        %291 = vmatpush.bf16.xpose.msra.mxu0 0
        %292 = vmatpush.bf16.xpose.msra.mxu0 %v286
        %293 = vmatpush.bf16.xpose.msra.mxu0 %v283
        %294 = vmatpush.bf16.xpose.msra.mxu0 %v280
        %295 = vmatpush.bf16.xpose.msra.mxu0 %v277
        %296 = vmatmul.bf16.gmra.mxu0 %v274
        %v297 = vpop.f32.mrf.mxu0
        %v298 = vadd.f32 0.0, %v297
        %v299 = vpop.f32.mrf.mxu0
        %v300 = vadd.f32 0.0, %v299
        %301 = vdwg.mxu0
        %s302 = scalar_lea.vmem %s3, %s239
        %v303 = vld [vmem:[%s302] sm:$0xff]
        %v304 = vld [vmem:[%s302 + $0x8] sm:$0xff]
        %s305 = scalar_lea.vmem %s4, %s239
        %v306 = vld [vmem:[%s305] sm:$0xff]
        %v307 = vld [vmem:[%s305 + $0x8] sm:$0xff]
        %v308 = vmul.f32 %v298, %v303
        %v309 = vmul.f32 %v300, %v304
        %312 = vrot.lane.b32.xlu0 %v306, 32
        %v313 = vpop.permute.xlu0 %312
        %314 = vrot.lane.b32.xlu0 %v307, 32
        %v315 = vpop.permute.xlu0 %314
        %v318 = vmul.f32 %v298, %v313
        %v319 = vmul.f32 %v300, %v315
        %322 = vrot.lane.b32.xlu0 %v318, 96
        %v323 = vpop.permute.xlu0 %322
        %324 = vrot.lane.b32.xlu0 %v319, 96
        %v325 = vpop.permute.xlu0 %324
        %v328 = vadd.f32 %v308, %v323
        %v329 = vadd.f32 %v309, %v325
        %332 = vrot.lane.b32.xlu0 %v328, 120
        %v333 = vpop.permute.xlu0 %332
        %334 = vrot.lane.b32.xlu0 %v329, 120
        %v335 = vpop.permute.xlu0 %334
        %338 = vrot.lane.b32.xlu0 %v328, 112
        %v339 = vpop.permute.xlu0 %338
        %340 = vrot.lane.b32.xlu0 %v329, 112
        %v341 = vpop.permute.xlu0 %340
        %344 = vrot.lane.b32.xlu0 %v328, 104
        %v345 = vpop.permute.xlu0 %344
        %346 = vrot.lane.b32.xlu0 %v329, 104
        %v347 = vpop.permute.xlu0 %346
        %v350 = vpack.c.bf16 %v328, %v328
        %v351 = vpack.c.bf16 %v329, %v329
        %v352 = vpack.c.bf16 %v333, %v333
        %v353 = vpack.c.bf16 %v335, %v335
        %v354 = vpack.c.bf16 %v339, %v339
        %v355 = vpack.c.bf16 %v341, %v341
        %v356 = vpack.c.bf16 %v345, %v345
        %v357 = vpack.c.bf16 %v347, %v347
        %v358 = vlaneseq
        %v359 = vshrl.u32 %v358, 7
        %v360 = vadd.s32 %v359, 8
        %v361 = vstv %s239
        %v362 = vadd.s32 %v361, %v359
        %v363 = vadd.s32 %v361, %v360
        %v364 = vlaneseq
        %v365 = vand.u32 %v364, 127
        %v366 = vld [vmem:[%s236] sm:$0xff]
        %v367 = vld [vmem:[%s236 + $0x8] sm:$0xff]
        %v368 = vpack.c.bf16 %v367, %v366
        %v369 = vld [vmem:[%s1 + $0x20] sm:$0xf]
        %v370 = vld [vmem:[%s1 + $0x24] sm:$0xf]
        %v371 = vld [vmem:[%s1 + $0x28] sm:$0xf]
        %v372 = vld [vmem:[%s1 + $0x2c] sm:$0xf]
        %v373 = vld [vmem:[%s1 + $0x30] sm:$0xf]
        %v374 = vld [vmem:[%s1 + $0x34] sm:$0xf]
        %v375 = vld [vmem:[%s1 + $0x38] sm:$0xf]
        %v376 = vld [vmem:[%s1 + $0x3c] sm:$0xf]
        %v377 = vld [vmem:[%s1 + $0x40] sm:$0xf]
        %v378 = vld [vmem:[%s1 + $0x44] sm:$0xf]
        %v379 = vld [vmem:[%s1 + $0x48] sm:$0xf]
        %v380 = vld [vmem:[%s1 + $0x4c] sm:$0xf]
        %v393 = vunpack.c.l.b16 %v369
        %v394 = vunpack.c.l.b16 %v370
        %v395 = vunpack.c.l.b16 %v371
        %v396 = vunpack.c.l.b16 %v372
        %v397 = vunpack.c.l.b16 %v373
        %v398 = vunpack.c.l.b16 %v374
        %v399 = vunpack.c.l.b16 %v375
        %v400 = vunpack.c.l.b16 %v376
        %v401 = vunpack.c.l.b16 %v377
        %v402 = vunpack.c.l.b16 %v378
        %v403 = vunpack.c.l.b16 %v379
        %v404 = vunpack.c.l.b16 %v380
        %v405 = vpack.c.b16 %v394, %v393
        %v406 = vpack.c.b16 %v396, %v395
        %v407 = vpack.c.b16 %v398, %v397
        %v408 = vpack.c.b16 %v400, %v399
        %v409 = vpack.c.b16 %v402, %v401
        %v410 = vpack.c.b16 %v404, %v403
        %v412 = vsel %vm272, %v368, 0
        %v415 = vsel %vm272, %v405, 0
        %v418 = vsel %vm272, %v406, 0
        %v421 = vsel %vm272, %v407, 0
        %v424 = vsel %vm272, %v408, 0
        %v427 = vsel %vm272, %v409, 0
        %v430 = vsel %vm272, %v410, 0
        %432 = vmatpush.bf16.xpose.msra.mxu0 0
        %433 = vmatpush.bf16.xpose.msra.mxu0 0
        %434 = vmatpush.bf16.xpose.msra.mxu0 %v430
        %435 = vmatpush.bf16.xpose.msra.mxu0 %v427
        %436 = vmatpush.bf16.xpose.msra.mxu0 %v424
        %437 = vmatpush.bf16.xpose.msra.mxu0 %v421
        %438 = vmatpush.bf16.xpose.msra.mxu0 %v418
        %439 = vmatpush.bf16.xpose.msra.mxu0 %v415
        %440 = vmatmul.bf16.gmra.mxu0 %v412
        %v441 = vpop.f32.mrf.mxu0
        %v442 = vadd.f32 0.0, %v441
        %v443 = vpop.f32.mrf.mxu0
        %v444 = vadd.f32 0.0, %v443
        %445 = vdwg.mxu0
        %v446 = vld [vmem:[%s3] sm:$0xff]
        %v447 = vld [vmem:[%s3 + $0x8] sm:$0xff]
        %v448 = vld [vmem:[%s4] sm:$0xff]
        %v449 = vld [vmem:[%s4 + $0x8] sm:$0xff]
        %v450 = vmul.f32 %v442, %v446
        %v451 = vmul.f32 %v444, %v447
        %454 = vrot.lane.b32.xlu0 %v448, 32
        %v455 = vpop.permute.xlu0 %454
        %456 = vrot.lane.b32.xlu0 %v449, 32
        %v457 = vpop.permute.xlu0 %456
        %v460 = vmul.f32 %v442, %v455
        %v461 = vmul.f32 %v444, %v457
        %464 = vrot.lane.b32.xlu0 %v460, 96
        %v465 = vpop.permute.xlu0 %464
        %466 = vrot.lane.b32.xlu0 %v461, 96
        %v467 = vpop.permute.xlu0 %466
        %v470 = vadd.f32 %v450, %v465
        %v471 = vadd.f32 %v451, %v467
        %474 = vrot.lane.b32.xlu0 %v470, 120
        %v475 = vpop.permute.xlu0 %474
        %476 = vrot.lane.b32.xlu0 %v471, 120
        %v477 = vpop.permute.xlu0 %476
        %480 = vrot.lane.b32.xlu0 %v470, 112
        %v481 = vpop.permute.xlu0 %480
        %482 = vrot.lane.b32.xlu0 %v471, 112
        %v483 = vpop.permute.xlu0 %482
        %486 = vrot.lane.b32.xlu0 %v470, 104
        %v487 = vpop.permute.xlu0 %486
        %488 = vrot.lane.b32.xlu0 %v471, 104
        %v489 = vpop.permute.xlu0 %488
        %v492 = vpack.c.bf16 %v470, %v470
        %v493 = vpack.c.bf16 %v471, %v471
        %v494 = vpack.c.bf16 %v475, %v475
        %v495 = vpack.c.bf16 %v477, %v477
        %v496 = vpack.c.bf16 %v481, %v481
        %v497 = vpack.c.bf16 %v483, %v483
        %v498 = vpack.c.bf16 %v487, %v487
        %v499 = vpack.c.bf16 %v489, %v489
        %502 = vrot.lane.b32.xlu0 %v442, 120
        %v503 = vpop.permute.xlu0 %502
        %504 = vrot.lane.b32.xlu0 %v444, 120
        %v505 = vpop.permute.xlu0 %504
        %508 = vrot.lane.b32.xlu0 %v442, 112
        %v509 = vpop.permute.xlu0 %508
        %510 = vrot.lane.b32.xlu0 %v444, 112
        %v511 = vpop.permute.xlu0 %510
        %514 = vrot.lane.b32.xlu0 %v442, 104
        %v515 = vpop.permute.xlu0 %514
        %516 = vrot.lane.b32.xlu0 %v444, 104
        %v517 = vpop.permute.xlu0 %516
        %v520 = vpack.c.bf16 %v442, %v442
        %v521 = vpack.c.bf16 %v444, %v444
        %v522 = vpack.c.bf16 %v503, %v503
        %v523 = vpack.c.bf16 %v505, %v505
        %v524 = vpack.c.bf16 %v509, %v509
        %v525 = vpack.c.bf16 %v511, %v511
        %v526 = vpack.c.bf16 %v515, %v515
        %v527 = vpack.c.bf16 %v517, %v517
        %v530 = vunpack.c.l.b16 %v350
        %v531 = vunpack.c.l.b16 %v351
        %v532 = vpack.c.b16 %v531, %v530
        %v535 = vunpack.c.l.b16 %v492
        %v536 = vunpack.c.l.b16 %v493
        %v537 = vpack.c.b16 %v536, %v535
        %vm538 = vcmask 64512
        %v540 = vsel %vm538, %v532, 0
        %v543 = vsel %vm538, %v537, 0
        %545 = vmatpush.bf16.xpose.msra.mxu0 0
        %546 = vmatpush.bf16.xpose.msra.mxu0 0
        %547 = vmatpush.bf16.xpose.msra.mxu0 0
        %548 = vmatpush.bf16.xpose.msra.mxu0 0
        %549 = vmatpush.bf16.xpose.msra.mxu0 0
        %550 = vmatpush.bf16.xpose.msra.mxu0 0
        %551 = vmatpush.bf16.xpose.msra.mxu0 0
        %552 = vmatpush.bf16.xpose.msra.mxu0 %v543
        %553 = vmatmul.bf16.gmra.mxu0 %v540
        %v554 = vpop.f32.mrf.mxu0
        %v555 = vadd.f32 0.0, %v554
        %v556 = vpop.f32.mrf.mxu0
        %v557 = vadd.f32 0.0, %v556
        %558 = vdwg.mxu0
        %v561 = vunpack.c.l.b16 %v352
        %v562 = vunpack.c.l.b16 %v353
        %v563 = vpack.c.b16 %v562, %v561
        %v566 = vunpack.c.l.b16 %v494
        %v567 = vunpack.c.l.b16 %v495
        %v568 = vpack.c.b16 %v567, %v566
        %v570 = vsel %vm538, %v563, 0
        %v573 = vsel %vm538, %v568, 0
        %575 = vmatpush.bf16.xpose.msra.mxu0 0
        %576 = vmatpush.bf16.xpose.msra.mxu0 0
        %577 = vmatpush.bf16.xpose.msra.mxu0 0
        %578 = vmatpush.bf16.xpose.msra.mxu0 0
        %579 = vmatpush.bf16.xpose.msra.mxu0 0
        %580 = vmatpush.bf16.xpose.msra.mxu0 0
        %581 = vmatpush.bf16.xpose.msra.mxu0 0
        %582 = vmatpush.bf16.xpose.msra.mxu0 %v573
        %583 = vmatmul.bf16.gmra.mxu0 %v570
        %v584 = vpop.f32.mrf.mxu0
        %v585 = vadd.f32 0.0, %v584
        %v586 = vpop.f32.mrf.mxu0
        %v587 = vadd.f32 0.0, %v586
        %588 = vdwg.mxu0
        %v591 = vunpack.c.l.b16 %v354
        %v592 = vunpack.c.l.b16 %v355
        %v593 = vpack.c.b16 %v592, %v591
        %v596 = vunpack.c.l.b16 %v496
        %v597 = vunpack.c.l.b16 %v497
        %v598 = vpack.c.b16 %v597, %v596
        %v600 = vsel %vm538, %v593, 0
        %v603 = vsel %vm538, %v598, 0
        %605 = vmatpush.bf16.xpose.msra.mxu0 0
        %606 = vmatpush.bf16.xpose.msra.mxu0 0
        %607 = vmatpush.bf16.xpose.msra.mxu0 0
        %608 = vmatpush.bf16.xpose.msra.mxu0 0
        %609 = vmatpush.bf16.xpose.msra.mxu0 0
        %610 = vmatpush.bf16.xpose.msra.mxu0 0
        %611 = vmatpush.bf16.xpose.msra.mxu0 0
        %612 = vmatpush.bf16.xpose.msra.mxu0 %v603
        %613 = vmatmul.bf16.gmra.mxu0 %v600
        %v614 = vpop.f32.mrf.mxu0
        %v615 = vadd.f32 0.0, %v614
        %v616 = vpop.f32.mrf.mxu0
        %v617 = vadd.f32 0.0, %v616
        %618 = vdwg.mxu0
        %v621 = vunpack.c.l.b16 %v356
        %v622 = vunpack.c.l.b16 %v357
        %v623 = vpack.c.b16 %v622, %v621
        %v626 = vunpack.c.l.b16 %v498
        %v627 = vunpack.c.l.b16 %v499
        %v628 = vpack.c.b16 %v627, %v626
        %v630 = vsel %vm538, %v623, 0
        %v633 = vsel %vm538, %v628, 0
        %635 = vmatpush.bf16.xpose.msra.mxu0 0
        %636 = vmatpush.bf16.xpose.msra.mxu0 0
        %637 = vmatpush.bf16.xpose.msra.mxu0 0
        %638 = vmatpush.bf16.xpose.msra.mxu0 0
        %639 = vmatpush.bf16.xpose.msra.mxu0 0
        %640 = vmatpush.bf16.xpose.msra.mxu0 0
        %641 = vmatpush.bf16.xpose.msra.mxu0 0
        %642 = vmatpush.bf16.xpose.msra.mxu0 %v633
        %643 = vmatmul.bf16.gmra.mxu0 %v630
        %v644 = vpop.f32.mrf.mxu0
        %v645 = vadd.f32 0.0, %v644
        %v646 = vpop.f32.mrf.mxu0
        %v647 = vadd.f32 0.0, %v646
        %648 = vdwg.mxu0
        %v649 = vstv 0
        %v650 = vadd.s32 %v649, %v365
        %vm651 = vcmp.ge.s32.totalorder %v362, %v650
        %vm652 = vcmp.ge.s32.totalorder %v363, %v650
        %v653 = vsel %vm651, 1, 0
        %v654 = vsel %vm652, 1, 0
        %vm655 = vcmp.eq.s32.totalorder %v653, 1
        %vm656 = vcmp.eq.s32.totalorder %v654, 1
        %v657 = vsel %vm655, %v555, -1e+30
        %v658 = vsel %vm656, %v557, -1e+30
        %v659 = vsel %vm655, %v585, -1e+30
        %v660 = vsel %vm656, %v587, -1e+30
        %v661 = vsel %vm655, %v615, -1e+30
        %v662 = vsel %vm656, %v617, -1e+30
        %v663 = vsel %vm655, %v645, -1e+30
        %v664 = vsel %vm656, %v647, -1e+30
        %vm665 = vcmask 130048
        %v666 = vsel %vm665, %v657, -inf
        %667 = vmax.xlane.f32.xlu0 %v666
        %v668 = vpop.xlane.xlu0 %667
        %v669 = vsel %vm665, %v658, -inf
        %670 = vmax.xlane.f32.xlu0 %v669
        %v671 = vpop.xlane.xlu0 %670
        %v672 = vsel %vm665, %v659, -inf
        %673 = vmax.xlane.f32.xlu0 %v672
        %v674 = vpop.xlane.xlu0 %673
        %v675 = vsel %vm665, %v660, -inf
        %676 = vmax.xlane.f32.xlu0 %v675
        %v677 = vpop.xlane.xlu0 %676
        %v678 = vsel %vm665, %v661, -inf
        %679 = vmax.xlane.f32.xlu0 %v678
        %v680 = vpop.xlane.xlu0 %679
        %v681 = vsel %vm665, %v662, -inf
        %682 = vmax.xlane.f32.xlu0 %v681
        %v683 = vpop.xlane.xlu0 %682
        %v684 = vsel %vm665, %v663, -inf
        %685 = vmax.xlane.f32.xlu0 %v684
        %v686 = vpop.xlane.xlu0 %685
        %v687 = vsel %vm665, %v664, -inf
        %688 = vmax.xlane.f32.xlu0 %v687
        %v689 = vpop.xlane.xlu0 %688
        %v690 = vsub.f32 -inf, %v668
        %v691 = vsub.f32 -inf, %v671
        %v692 = vsub.f32 -inf, %v674
        %v693 = vsub.f32 -inf, %v677
        %v694 = vsub.f32 -inf, %v680
        %v695 = vsub.f32 -inf, %v683
        %v696 = vsub.f32 -inf, %v686
        %v697 = vsub.f32 -inf, %v689
        %v698 = vmul.f32 %v690, 1.442695
        %v699 = vpow.pop %v698
        %v700 = vmul.f32 %v691, 1.442695
        %v701 = vpow.pop %v700
        %v702 = vmul.f32 %v692, 1.442695
        %v703 = vpow.pop %v702
        %v704 = vmul.f32 %v693, 1.442695
        %v705 = vpow.pop %v704
        %v706 = vmul.f32 %v694, 1.442695
        %v707 = vpow.pop %v706
        %v708 = vmul.f32 %v695, 1.442695
        %v709 = vpow.pop %v708
        %v710 = vmul.f32 %v696, 1.442695
        %v711 = vpow.pop %v710
        %v712 = vmul.f32 %v697, 1.442695
        %v713 = vpow.pop %v712
        %v714 = vsub.f32 %v657, %v668
        %v715 = vsub.f32 %v658, %v671
        %v716 = vsub.f32 %v659, %v674
        %v717 = vsub.f32 %v660, %v677
        %v718 = vsub.f32 %v661, %v680
        %v719 = vsub.f32 %v662, %v683
        %v720 = vsub.f32 %v663, %v686
        %v721 = vsub.f32 %v664, %v689
        %v722 = vmul.f32 %v714, 1.442695
        %v723 = vpow.pop %v722
        %v724 = vmul.f32 %v715, 1.442695
        %v725 = vpow.pop %v724
        %v726 = vmul.f32 %v716, 1.442695
        %v727 = vpow.pop %v726
        %v728 = vmul.f32 %v717, 1.442695
        %v729 = vpow.pop %v728
        %v730 = vmul.f32 %v718, 1.442695
        %v731 = vpow.pop %v730
        %v732 = vmul.f32 %v719, 1.442695
        %v733 = vpow.pop %v732
        %v734 = vmul.f32 %v720, 1.442695
        %v735 = vpow.pop %v734
        %v736 = vmul.f32 %v721, 1.442695
        %v737 = vpow.pop %v736
        %v738 = vmul.f32 %v699, 0.0
        %v739 = vmul.f32 %v701, 0.0
        %v740 = vmul.f32 %v703, 0.0
        %v741 = vmul.f32 %v705, 0.0
        %v742 = vmul.f32 %v707, 0.0
        %v743 = vmul.f32 %v709, 0.0
        %v744 = vmul.f32 %v711, 0.0
        %v745 = vmul.f32 %v713, 0.0
        %v746 = vsel %vm665, %v723, 0.0
        %747 = vadd.xlane.f32.xlu0 %v746
        %v748 = vpop.xlane.xlu0 %747
        %v749 = vsel %vm665, %v725, 0.0
        %750 = vadd.xlane.f32.xlu0 %v749
        %v751 = vpop.xlane.xlu0 %750
        %v752 = vsel %vm665, %v727, 0.0
        %753 = vadd.xlane.f32.xlu0 %v752
        %v754 = vpop.xlane.xlu0 %753
        %v755 = vsel %vm665, %v729, 0.0
        %756 = vadd.xlane.f32.xlu0 %v755
        %v757 = vpop.xlane.xlu0 %756
        %v758 = vsel %vm665, %v731, 0.0
        %759 = vadd.xlane.f32.xlu0 %v758
        %v760 = vpop.xlane.xlu0 %759
        %v761 = vsel %vm665, %v733, 0.0
        %762 = vadd.xlane.f32.xlu0 %v761
        %v763 = vpop.xlane.xlu0 %762
        %v764 = vsel %vm665, %v735, 0.0
        %765 = vadd.xlane.f32.xlu0 %v764
        %v766 = vpop.xlane.xlu0 %765
        %v767 = vsel %vm665, %v737, 0.0
        %768 = vadd.xlane.f32.xlu0 %v767
        %v769 = vpop.xlane.xlu0 %768
        %v770 = vadd.f32 %v738, %v748
        %v771 = vadd.f32 %v739, %v751
        %v772 = vadd.f32 %v740, %v754
        %v773 = vadd.f32 %v741, %v757
        %v774 = vadd.f32 %v742, %v760
        %v775 = vadd.f32 %v743, %v763
        %v776 = vadd.f32 %v744, %v766
        %v777 = vadd.f32 %v745, %v769
        %v778 = vpack.c.bf16 %v723, %v723
        %v779 = vpack.c.bf16 %v725, %v725
        %v780 = vpack.c.bf16 %v727, %v727
        %v781 = vpack.c.bf16 %v729, %v729
        %v782 = vpack.c.bf16 %v731, %v731
        %v783 = vpack.c.bf16 %v733, %v733
        %v784 = vpack.c.bf16 %v735, %v735
        %v785 = vpack.c.bf16 %v737, %v737
        %v788 = vunpack.c.l.b16 %v778
        %v789 = vunpack.c.l.b16 %v779
        %v790 = vpack.c.b16 %v789, %v788
        %v793 = vunpack.c.l.b16 %v520
        %v794 = vunpack.c.l.b16 %v521
        %v795 = vpack.c.b16 %v794, %v793
        %796 = vrot.lane.b32.xlu0 %v795, 64
        %v797 = vpop.permute.xlu0 %796
        %v800 = vsel %vm665, %v790, 0
        %802 = vmatpush.bf16.msra.mxu0 0
        %803 = vmatpush.bf16.msra.mxu0 0
        %804 = vmatpush.bf16.msra.mxu0 0
        %805 = vmatpush.bf16.msra.mxu0 0
        %806 = vmatpush.bf16.msra.mxu0 0
        %807 = vmatpush.bf16.msra.mxu0 0
        %808 = vmatpush.bf16.msra.mxu0 0
        %809 = vmatpush.bf16.msra.mxu0 %v797
        %810 = vmatmul.bf16.gmra.mxu0 %v800
        %v811 = vpop.f32.mrf.mxu0
        %v812 = vadd.f32 0.0, %v811
        %v813 = vpop.f32.mrf.mxu0
        %v814 = vadd.f32 0.0, %v813
        %815 = vdwg.mxu0
        %v818 = vunpack.c.l.b16 %v780
        %v819 = vunpack.c.l.b16 %v781
        %v820 = vpack.c.b16 %v819, %v818
        %v823 = vunpack.c.l.b16 %v522
        %v824 = vunpack.c.l.b16 %v523
        %v825 = vpack.c.b16 %v824, %v823
        %826 = vrot.lane.b32.xlu0 %v825, 64
        %v827 = vpop.permute.xlu0 %826
        %v830 = vsel %vm665, %v820, 0
        %832 = vmatpush.bf16.msra.mxu0 0
        %833 = vmatpush.bf16.msra.mxu0 0
        %834 = vmatpush.bf16.msra.mxu0 0
        %835 = vmatpush.bf16.msra.mxu0 0
        %836 = vmatpush.bf16.msra.mxu0 0
        %837 = vmatpush.bf16.msra.mxu0 0
        %838 = vmatpush.bf16.msra.mxu0 0
        %839 = vmatpush.bf16.msra.mxu0 %v827
        %840 = vmatmul.bf16.gmra.mxu0 %v830
        %v841 = vpop.f32.mrf.mxu0
        %v842 = vadd.f32 0.0, %v841
        %v843 = vpop.f32.mrf.mxu0
        %v844 = vadd.f32 0.0, %v843
        %845 = vdwg.mxu0
        %v848 = vunpack.c.l.b16 %v782
        %v849 = vunpack.c.l.b16 %v783
        %v850 = vpack.c.b16 %v849, %v848
        %v853 = vunpack.c.l.b16 %v524
        %v854 = vunpack.c.l.b16 %v525
        %v855 = vpack.c.b16 %v854, %v853
        %856 = vrot.lane.b32.xlu0 %v855, 64
        %v857 = vpop.permute.xlu0 %856
        %v860 = vsel %vm665, %v850, 0
        %862 = vmatpush.bf16.msra.mxu0 0
        %863 = vmatpush.bf16.msra.mxu0 0
        %864 = vmatpush.bf16.msra.mxu0 0
        %865 = vmatpush.bf16.msra.mxu0 0
        %866 = vmatpush.bf16.msra.mxu0 0
        %867 = vmatpush.bf16.msra.mxu0 0
        %868 = vmatpush.bf16.msra.mxu0 0
        %869 = vmatpush.bf16.msra.mxu0 %v857
        %870 = vmatmul.bf16.gmra.mxu0 %v860
        %v871 = vpop.f32.mrf.mxu0
        %v872 = vadd.f32 0.0, %v871
        %v873 = vpop.f32.mrf.mxu0
        %v874 = vadd.f32 0.0, %v873
        %875 = vdwg.mxu0
        %v878 = vunpack.c.l.b16 %v784
        %v879 = vunpack.c.l.b16 %v785
        %v880 = vpack.c.b16 %v879, %v878
        %v883 = vunpack.c.l.b16 %v526
        %v884 = vunpack.c.l.b16 %v527
        %v885 = vpack.c.b16 %v884, %v883
        %886 = vrot.lane.b32.xlu0 %v885, 64
        %v887 = vpop.permute.xlu0 %886
        %v890 = vsel %vm665, %v880, 0
        %892 = vmatpush.bf16.msra.mxu0 0
        %893 = vmatpush.bf16.msra.mxu0 0
        %894 = vmatpush.bf16.msra.mxu0 0
        %895 = vmatpush.bf16.msra.mxu0 0
        %896 = vmatpush.bf16.msra.mxu0 0
        %897 = vmatpush.bf16.msra.mxu0 0
        %898 = vmatpush.bf16.msra.mxu0 0
        %899 = vmatpush.bf16.msra.mxu0 %v887
        %900 = vmatmul.bf16.gmra.mxu0 %v890
        %v901 = vpop.f32.mrf.mxu0
        %v902 = vadd.f32 0.0, %v901
        %v903 = vpop.f32.mrf.mxu0
        %v904 = vadd.f32 0.0, %v903
        %905 = vdwg.mxu0
        %v906 = vadd.f32 %v738, %v812
        %v907 = vadd.f32 %v739, %v814
        %v908 = vadd.f32 %v740, %v842
        %v909 = vadd.f32 %v741, %v844
        %v910 = vadd.f32 %v742, %v872
        %v911 = vadd.f32 %v743, %v874
        %v912 = vadd.f32 %v744, %v902
        %v913 = vadd.f32 %v745, %v904
        %v914 = vrcp.pop %v770
        %v915 = vrcp.pop %v771
        %v916 = vrcp.pop %v772
        %v917 = vrcp.pop %v773
        %v918 = vrcp.pop %v774
        %v919 = vrcp.pop %v775
        %v920 = vrcp.pop %v776
        %v921 = vrcp.pop %v777
        %v922 = vmul.f32 %v906, %v914
        %v923 = vmul.f32 %v907, %v915
        %v924 = vmul.f32 %v908, %v916
        %v925 = vmul.f32 %v909, %v917
        %v926 = vmul.f32 %v910, %v918
        %v927 = vmul.f32 %v911, %v919
        %v928 = vmul.f32 %v912, %v920
        %v929 = vmul.f32 %v913, %v921
        %v930 = vpack.c.bf16 %v923, %v922
        %v931 = vld [vmem:[%s2] sm:$0xf]
        %v932 = vpack.c.bf16 %v925, %v924
        %s933 = scalar_lea.vmem %s2, 4
        %v934 = vld [vmem:[%s933] sm:$0xf]
        %v936 = vsel %vm538, %v932, 0
        %vm938 = vcmask 1043456
        %v940 = vsel %vm938, %v934, 0
        %942 = vmatpush.bf16.msra.mxu0 0
        %943 = vmatpush.bf16.msra.mxu0 0
        %944 = vmatpush.bf16.msra.mxu0 0
        %945 = vmatpush.bf16.msra.mxu0 0
        %946 = vmatpush.bf16.msra.mxu0 0
        %947 = vmatpush.bf16.msra.mxu0 0
        %948 = vmatpush.bf16.msra.mxu0 0
        %949 = vmatpush.bf16.msra.mxu0 %v940
        %950 = vmatmul.bf16.gmra.mxu0 %v936
        %v951 = vpop.f32.mrf.mxu0
        %v952 = vadd.f32 0.0, %v951
        %v953 = vpop.f32.mrf.mxu0
        %v954 = vadd.f32 0.0, %v953
        %955 = vdwg.mxu0
        %v957 = vsel %vm538, %v930, 0
        %v960 = vsel %vm938, %v931, 0
        %962 = vmatpush.bf16.msra.mxu0 0
        %963 = vmatpush.bf16.msra.mxu0 0
        %964 = vmatpush.bf16.msra.mxu0 0
        %965 = vmatpush.bf16.msra.mxu0 0
        %966 = vmatpush.bf16.msra.mxu0 0
        %967 = vmatpush.bf16.msra.mxu0 0
        %968 = vmatpush.bf16.msra.mxu0 0
        %969 = vmatpush.bf16.msra.mxu0 %v960
        %970 = vmatmul.bf16.gmra.mxu0 %v957
        %v971 = vpop.f32.mrf.mxu0
        %v972 = vadd.f32 %v952, %v971
        %v973 = vpop.f32.mrf.mxu0
        %v974 = vadd.f32 %v954, %v973
        %975 = vdwg.mxu0
        %v976 = vpack.c.bf16 %v927, %v926
        %s977 = scalar_lea.vmem %s2, 8
        %v978 = vld [vmem:[%s977] sm:$0xf]
        %v980 = vsel %vm538, %v976, 0
        %v983 = vsel %vm938, %v978, 0
        %985 = vmatpush.bf16.msra.mxu0 0
        %986 = vmatpush.bf16.msra.mxu0 0
        %987 = vmatpush.bf16.msra.mxu0 0
        %988 = vmatpush.bf16.msra.mxu0 0
        %989 = vmatpush.bf16.msra.mxu0 0
        %990 = vmatpush.bf16.msra.mxu0 0
        %991 = vmatpush.bf16.msra.mxu0 0
        %992 = vmatpush.bf16.msra.mxu0 %v983
        %993 = vmatmul.bf16.gmra.mxu0 %v980
        %v994 = vpop.f32.mrf.mxu0
        %v995 = vadd.f32 0.0, %v994
        %v996 = vpop.f32.mrf.mxu0
        %v997 = vadd.f32 0.0, %v996
        %998 = vdwg.mxu0
        %v999 = vadd.f32 %v972, %v995
        %v1000 = vadd.f32 %v974, %v997
        %v1001 = vpack.c.bf16 %v929, %v928
        %s1002 = scalar_lea.vmem %s2, 12
        %v1003 = vld [vmem:[%s1002] sm:$0xf]
        %v1005 = vsel %vm538, %v1001, 0
        %v1008 = vsel %vm938, %v1003, 0
        %1010 = vmatpush.bf16.msra.mxu0 0
        %1011 = vmatpush.bf16.msra.mxu0 0
        %1012 = vmatpush.bf16.msra.mxu0 0
        %1013 = vmatpush.bf16.msra.mxu0 0
        %1014 = vmatpush.bf16.msra.mxu0 0
        %1015 = vmatpush.bf16.msra.mxu0 0
        %1016 = vmatpush.bf16.msra.mxu0 0
        %1017 = vmatpush.bf16.msra.mxu0 %v1008
        %1018 = vmatmul.bf16.gmra.mxu0 %v1005
        %v1019 = vpop.f32.mrf.mxu0
        %v1020 = vadd.f32 0.0, %v1019
        %v1021 = vpop.f32.mrf.mxu0
        %v1022 = vadd.f32 0.0, %v1021
        %1023 = vdwg.mxu0
        %v1024 = vadd.f32 %v999, %v1020
        %v1025 = vadd.f32 %v1000, %v1022
        %1026 = vst.msk [vmem:[%s231] sm:$0xff] %vm272, %v1024
        %1027 = vst.msk [vmem:[%s231 + $0x8] sm:$0xff] %vm272, %v1025
        %s1028 = sand.u32 %s151, 1
        %s1029 = scalar_lea.sflag [#allocation3], %s1028
        %s1030 = sand.u32 %s151, 1
        %s1031 = smul.addr %s1030, 16
        %s1032 = scalar_lea.vmem [#allocation2], %s1031
        // Predicated region
        $region41: #{self_attn_flex_forward.1} parent=39 // pred_check
          %p1033 = pneg %p161
        $region42: #{self_attn_flex_forward.1} parent=39 // pred_check_branch
          %1035 = sbr.rel (%p1033) target = $region44
        $region43: #{self_attn_flex_forward.1} parent=39 // pred_region
          %s1036 = smul.u32 2, %s24
          %1038 = vsyncadd %s1029, 0
          %s1039 = smul.addr %s23, 2
          %s1040 = sadd.s32 %s1036, %s1039
          %s1041 = smul.addr %s1040, 8
          %s1042 = scalar_lea.hbm %s5, %s1041
          %s1043 = sshll.u32 %s1032, 4
          %s1044 = int_to_ptr.vmem [resolvable:$true] %s1043
          %s1045 = sshll.u32 %s1042, 4
          %s1046 = int_to_ptr.hbm [resolvable:$true] %s1045
          %1051 = dma.vmem_to_hbm [thread:$0]  %s1044, 256, %s1046, %s1029, 128, 128, 8
        $region44: #{self_attn_flex_forward.1} parent=39 // pred_fallthru
          _
      $region40: #{self_attn_flex_forward.1} parent=5 // pred_fallthru
        _
      %p1052 = scmp.le.s32.totalorder 2, %s14
      // Predicated region
      $region45: #{self_attn_flex_forward.1} parent=5 // pred_check
        %p1053 = pneg %p1052
      $region46: #{self_attn_flex_forward.1} parent=5 // pred_check_branch
        %1055 = sbr.rel (%p1053) target = $region48
      $region47: #{self_attn_flex_forward.1} parent=5 // pred_region
        %s1056 = ssub.s32 %s14, 2
        // Predicated region
        $region49: #{self_attn_flex_forward.1} parent=47 // pred_check
          %p1057 = pneg %p167
        $region50: #{self_attn_flex_forward.1} parent=47 // pred_check_branch
          %1059 = sbr.rel (%p1057) target = $region52
        $region51: #{self_attn_flex_forward.1} parent=47 // pred_region
          %s1060 = sand.u32 %s152, 1
          %s1061 = scalar_lea.sflag [#allocation3], %s1060
          %s1062 = sand.u32 %s152, 1
          %s1063 = smul.addr %s1062, 16
          %s1064 = scalar_lea.vmem [#allocation2], %s1063
          %1066 = dma.done %s1061, 256
        $region52: #{self_attn_flex_forward.1} parent=47 // pred_fallthru
          _
      $region48: #{self_attn_flex_forward.1} parent=5 // pred_fallthru
        _
    $region6: #{self_attn_flex_forward.1} parent=1 // loop_footer
      %s18 = sadd.s32 1, %s14
    $region7: #{self_attn_flex_forward.1} parent=1 // loop_footer_branch
      %13 = sbr.rel target = $region3
    $region8: #{self_attn_flex_forward.1} parent=1 // loop_exit
      _
    %1067 = vsyncpa [#allocation3], 1
    %s1068 = scalar_lea.sflag [#allocation3], 1
    %1069 = vsyncpa %s1068, 1

</llo_original>
